<compile_context>
chip_gen: v5e
topology: v5e:2x2
jax: 0.10.0
libtpu: 0.0.40
codegen_flags: <defaults>
</compile_context>

<pallas_src>
import functools
import math

import numpy as np

import jax
import jax.numpy as jnp
from jax.experimental import pallas as pl
from jax.experimental.pallas import tpu as pltpu


def _round_up(v, m):
    return (v + m - 1) // m * m


def _vmem_capacity_bytes():
    """Per-core VMEM capacity; conservative 64 MiB fallback (v7x per-TC)."""
    try:
        cap = int(pltpu.get_tpu_info().vmem_capacity_bytes)
        if cap > 0:
            return cap
    except Exception:
        pass
    return 64 * 1024 * 1024


def _linear_layer_kernel(xbf_ref, wt_ref, bng_ref, o_ref, *, norm, activate,
                         eps, inv_n):
    # Linear: bf16 x bf16 -> f32 accumulation on the MXU. The dropout mask and
    # the bf16 cast were folded into xbf once in the wrapper, so no per-tile
    # VPU work is repeated here. xbf's block index is constant across the grid,
    # so Pallas fetches it from HBM exactly once.
    y = jnp.dot(xbf_ref[...], wt_ref[...], preferred_element_type=jnp.float32)

    p = bng_ref[...]                                  # (8, TN): bias/gamma/beta rows

    if norm:
        # Bias is cancelled by mean subtraction -> skipped entirely.
        # Two-pass batch statistics (biased variance, PyTorch BN training mode):
        # robust against the E[y^2]-E[y]^2 cancellation, and the centered tensor
        # is reused for the fused scale/shift epilogue.
        mean = jnp.sum(y, axis=0, keepdims=True) * inv_n
        d = y - mean
        var = jnp.sum(d * d, axis=0, keepdims=True) * inv_n
        a = jax.lax.rsqrt(var + eps) * p[1:2, :]      # inv_std * gamma  (1, TN)
        y = d * a + p[2:3, :]                         # + beta
    else:
        y = y + p[0:1, :]                             # + bias

    if activate:
        y = jnp.tanh(y)

    o_ref[...] = y.astype(o_ref.dtype)


def prepare_linear_layer_params(w, b, gamma, beta):
    """One-time parameter prep (do NOT repeat per forward call):
    transpose W to (isize, osize), pad osize to a multiple of 128 for
    lane-dense tiles, cast to bf16, and stack bias/gamma/beta into one
    (8, osize_p) array so they travel as a single per-step DMA."""
    osize, isize = w.shape
    osize_p = _round_up(osize, 128)
    pad = osize_p - osize
    wt = jnp.pad(jnp.transpose(w), ((0, 0), (0, pad))).astype(jnp.bfloat16)
    bng = jnp.zeros((8, osize_p), jnp.float32)
    bng = bng.at[0, :osize].set(b.astype(jnp.float32))      # bias
    bng = bng.at[1, :osize].set(gamma.astype(jnp.float32))  # gamma
    bng = bng.at[2, :osize].set(beta.astype(jnp.float32))   # beta
    return wt, bng, osize


def _choose_tn(n, isize, osize_p, budget_bytes):
    """Largest lane-dense (multiple-of-128) tile width dividing osize_p that
    fits the double-buffered VMEM budget, while keeping >= 2 grid steps when
    osize_p >= 256 so both v7x TensorCores receive work."""
    fixed = 2 * n * isize * 2                         # masked bf16 x, double-buffered
    cands = [t for t in range(128, osize_p + 1, 128) if osize_p % t == 0]
    for tn in sorted(cands, reverse=True):
        if osize_p >= 256 and tn == osize_p:
            continue                                  # keep the parallel grid >= 2 steps
        per_tile = 2 * (isize * tn * 2 + 8 * tn * 4 + n * tn * 4)
        if fixed + per_tile <= budget_bytes:
            return tn
    # TODO(synk): add a K (isize) reduction grid axis fallback (accumulator
    #             scratch + pl.when(last-k) BN/tanh finalize) for the case where
    #             even tn=128 overshoots the budget (very large n * isize).
    return 128


def linear_layer_forward(x, wt, bng, osize, *, dropout_p=0.1, norm=True,
                         activate=True, rng_key=None, eps=1e-5,
                         out_dtype=jnp.float32):
    """x: (N, isize) f32; wt/bng from prepare_linear_layer_params."""
    n, isize = x.shape
    osize_p = wt.shape[1]

    # ---- Fold dropout (training semantics) + bf16 cast ONCE, outside the grid.
    #      Doing it per osize-tile in the kernel repeats (N x isize) VPU work
    #      grid-length times and doubles the streamed input bytes. ----
    if dropout_p > 0.0:
        if rng_key is None:
            rng_key = jax.random.PRNGKey(0)
        keep = jax.random.bernoulli(rng_key, 1.0 - dropout_p, x.shape)
        # When norm=True the 1/(1-p) rescale is exactly cancelled by BatchNorm.
        scale = jnp.float32(1.0) if norm else jnp.float32(1.0 / (1.0 - dropout_p))
        xbf = (jnp.where(keep, x, 0.0) * scale).astype(jnp.bfloat16)
    else:
        xbf = x.astype(jnp.bfloat16)

    # Generation-aware VMEM budget: ~44 MiB tile budget / 100 MiB cap on
    # 128-MiB parts (v5e/v6e), ~22 MiB / 51 MiB on v7x's 64-MiB VMEM.
    cap = _vmem_capacity_bytes()
    budget = int(0.35 * cap)
    vmem_limit = min(int(0.8 * cap), 100 * 1024 * 1024)

    tn = _choose_tn(n, isize, osize_p, budget)
    grid = (osize_p // tn,)

    kernel = functools.partial(
        _linear_layer_kernel,
        norm=bool(norm), activate=bool(activate),
        eps=float(eps), inv_n=float(1.0 / n))

    out_itemsize = np.dtype(out_dtype).itemsize
    flops = 2 * n * isize * osize_p
    bytes_accessed = (n * isize * 2                  # masked bf16 x (fetched once)
                      + isize * osize_p * 2          # W^T (bf16)
                      + 8 * osize_p * 4              # stacked bias/gamma/beta
                      + n * osize_p * out_itemsize)  # output
    transcendentals = n * osize_p if activate else 0

    out_p = pl.pallas_call(
        kernel,
        out_shape=jax.ShapeDtypeStruct((n, osize_p), out_dtype),
        grid_spec=pltpu.PrefetchScalarGridSpec(
            num_scalar_prefetch=0,
            grid=grid,
            in_specs=[
                pl.BlockSpec((n, isize), lambda j: (0, 0)),    # masked bf16 x
                pl.BlockSpec((isize, tn), lambda j: (0, j)),   # W^T tile (bf16)
                pl.BlockSpec((8, tn), lambda j: (0, j)),       # stacked bias/gamma/beta
            ],
            out_specs=pl.BlockSpec((n, tn), lambda j: (0, j)),
        ),
        compiler_params=pltpu.CompilerParams(
            dimension_semantics=("parallel",),
            vmem_limit_bytes=vmem_limit,
        ),
        cost_estimate=pl.CostEstimate(
            flops=flops, transcendentals=transcendentals,
            bytes_accessed=bytes_accessed),
    )(xbf, wt, bng)

    return out_p[:, :osize]


def _reference(x, w, b, gamma, beta, keep, dropout_p, norm, activate, eps):
    """Pure-JAX reference with exact PyTorch-module semantics (f32)."""
    xd = x
    if dropout_p > 0.0:
        xd = jnp.where(keep, x, 0.0) / (1.0 - dropout_p)
    y = xd @ w.T + b
    if norm:
        mean = jnp.mean(y, axis=0, keepdims=True)
        var = jnp.mean((y - mean) ** 2, axis=0, keepdims=True)
        y = (y - mean) / jnp.sqrt(var + eps) * gamma + beta
    if activate:
        y = jnp.tanh(y)
    return y


if __name__ == "__main__":
    # Small deterministic shapes: batch=8, isize=32, osize=64, dropout_p=0.1
    N, ISIZE, OSIZE = 8, 32, 64
    DROPOUT_P = 0.1
    EPS = 1e-5

    key = jax.random.PRNGKey(0)
    kx, kw, kb, kd = jax.random.split(key, 4)

    x = jax.random.normal(kx, (N, ISIZE), dtype=jnp.float32)

    # nn.Linear-style uniform(-1/sqrt(isize), 1/sqrt(isize)); BN gamma=1, beta=0.
    bound = 1.0 / math.sqrt(ISIZE)
    w = jax.random.uniform(kw, (OSIZE, ISIZE), jnp.float32, -bound, bound)
    b = jax.random.uniform(kb, (OSIZE,), jnp.float32, -bound, bound)
    gamma = jnp.ones((OSIZE,), dtype=jnp.float32)
    beta = jnp.zeros((OSIZE,), dtype=jnp.float32)

    # One-time parameter prep (transpose + pad + bf16 cast + stacked BN params).
    wt, bng, osize = prepare_linear_layer_params(w, b, gamma, beta)

    # ---- Training-mode path: Dropout -> Linear -> BatchNorm1d -> Tanh ----
    out = linear_layer_forward(x, wt, bng, osize,
                               dropout_p=DROPOUT_P, norm=True, activate=True,
                               rng_key=kd, eps=EPS)
    out = jax.block_until_ready(out)

    assert out.shape == (N, OSIZE) and out.dtype == jnp.float32
    assert bool(jnp.all(jnp.isfinite(out)))
    assert bool(jnp.all(jnp.abs(out) <= 1.0))   # tanh range

    keep = jax.random.bernoulli(kd, 1.0 - DROPOUT_P, x.shape)
    ref = _reference(x, w, b, gamma, beta, keep, DROPOUT_P, True, True, EPS)
    max_err = float(jnp.max(jnp.abs(out - ref)))
    assert max_err < 5e-2, f"max abs error vs reference (norm path): {max_err}"

    # ---- Inference-style path: no dropout, no BN (bias + tanh only) ----
    out2 = linear_layer_forward(x, wt, bng, osize,
                                dropout_p=0.0, norm=False, activate=True, eps=EPS)
    out2 = jax.block_until_ready(out2)
    ref2 = _reference(x, w, b, gamma, beta, None, 0.0, False, True, EPS)
    max_err2 = float(jnp.max(jnp.abs(out2 - ref2)))
    assert max_err2 < 5e-2, f"max abs error vs reference (no-norm path): {max_err2}"

    print("KERNEL_OK")
</pallas_src>

<mosaic_0001>
module attributes {stable_mosaic.version = 11 : i64} {
  func.func @_linear_layer_kernel(%arg0: i32, %arg1: memref<8x32xbf16, #tpu.memory_space<vmem>>, %arg2: memref<32x128xbf16, #tpu.memory_space<vmem>>, %arg3: memref<8x128xf32, #tpu.memory_space<vmem>>, %arg4: memref<8x128xf32, #tpu.memory_space<vmem>>) attributes {dimension_semantics = [#tpu.dimension_semantics<parallel>], iteration_bounds = array<i64: 1>, scalar_prefetch = 0 : i64, scratch_operands = 0 : i64, tpu.core_type = #tpu.core_type<tc>, window_params = [{pipeline_mode = #tpu.pipeline_mode<synchronous>, transform_indices = @transform_0, window_bounds = array<i64: 8, 32>}, {transform_indices = @transform_1, window_bounds = array<i64: 32, 128>}, {transform_indices = @transform_2, window_bounds = array<i64: 8, 128>}, {transform_indices = @transform_3, window_bounds = array<i64: 8, 128>}]} {
    %c0 = arith.constant 0 : index
    %c0_0 = arith.constant 0 : index
    %0 = vector.load %arg1[%c0, %c0_0] : memref<8x32xbf16, #tpu.memory_space<vmem>>, vector<8x32xbf16>
    %c0_1 = arith.constant 0 : index
    %c0_2 = arith.constant 0 : index
    %1 = vector.load %arg2[%c0_1, %c0_2] : memref<32x128xbf16, #tpu.memory_space<vmem>>, vector<32x128xbf16>
    %cst = arith.constant dense<0.000000e+00> : vector<8x128xf32>
    %2 = tpu.matmul %0, %1, %cst {dimension_numbers = #tpu.dot_dimension_numbers<[1], [0], [0], [1], [0, 0, 1, 1], [], []>} : vector<8x32xbf16>, vector<32x128xbf16>, vector<8x128xf32> -> vector<8x128xf32>
    %c0_3 = arith.constant 0 : index
    %c0_4 = arith.constant 0 : index
    %3 = vector.load %arg3[%c0_3, %c0_4] : memref<8x128xf32, #tpu.memory_space<vmem>>, vector<8x128xf32>
    %cst_5 = arith.constant dense<0.000000e+00> : vector<128xf32>
    %4 = vector.multi_reduction <add>, %2, %cst_5 [0] : vector<8x128xf32> to vector<128xf32>
    %5 = vector.shape_cast %4 : vector<128xf32> to vector<1x128xf32>
    %cst_6 = arith.constant 1.250000e-01 : f32
    %6 = vector.broadcast %cst_6 : f32 to vector<1x128xf32>
    %7 = arith.mulf %5, %6 : vector<1x128xf32>
    %8 = vector.broadcast %7 : vector<1x128xf32> to vector<8x128xf32>
    %9 = arith.subf %2, %8 : vector<8x128xf32>
    %10 = arith.mulf %9, %9 : vector<8x128xf32>
    %cst_7 = arith.constant dense<0.000000e+00> : vector<128xf32>
    %11 = vector.multi_reduction <add>, %10, %cst_7 [0] : vector<8x128xf32> to vector<128xf32>
    %12 = vector.shape_cast %11 : vector<128xf32> to vector<1x128xf32>
    %cst_8 = arith.constant 1.250000e-01 : f32
    %13 = vector.broadcast %cst_8 : f32 to vector<1x128xf32>
    %14 = arith.mulf %12, %13 : vector<1x128xf32>
    %cst_9 = arith.constant 9.99999974E-6 : f32
    %15 = vector.broadcast %cst_9 : f32 to vector<1x128xf32>
    %16 = arith.addf %14, %15 : vector<1x128xf32>
    %17 = math.rsqrt %16 : vector<1x128xf32>
    %18 = vector.extract_strided_slice %3 {offsets = [1, 0], sizes = [1, 128], strides = [1, 1]} : vector<8x128xf32> to vector<1x128xf32>
    %19 = arith.mulf %17, %18 : vector<1x128xf32>
    %20 = vector.broadcast %19 : vector<1x128xf32> to vector<8x128xf32>
    %21 = arith.mulf %9, %20 : vector<8x128xf32>
    %22 = vector.extract_strided_slice %3 {offsets = [2, 0], sizes = [1, 128], strides = [1, 1]} : vector<8x128xf32> to vector<1x128xf32>
    %23 = vector.broadcast %22 : vector<1x128xf32> to vector<8x128xf32>
    %24 = arith.addf %21, %23 : vector<8x128xf32>
    %25 = math.tanh %24 : vector<8x128xf32>
    %c0_10 = arith.constant 0 : index
    %c0_11 = arith.constant 0 : index
    %26 = vector.load %arg4[%c0_10, %c0_11] : memref<8x128xf32, #tpu.memory_space<vmem>>, vector<8x128xf32>
    tpu.vector_store %arg4[%c0_10, %c0_11], %25 {strides = array<i32>} : memref<8x128xf32, #tpu.memory_space<vmem>>, vector<8x128xf32>,
    return
  }
  func.func @transform_0(%arg0: i32) -> (i32, i32) {
    %c0_i32 = arith.constant 0 : i32
    %c0_i32_0 = arith.constant 0 : i32
    %c0_i32_1 = arith.constant 0 : i32
    return %c0_i32, %c0_i32_0 : i32, i32
  }
  func.func @transform_1(%arg0: i32) -> (i32, i32) {
    %c0_i32 = arith.constant 0 : i32
    %c0_i32_0 = arith.constant 0 : i32
    return %c0_i32, %arg0 : i32, i32
  }
  func.func @transform_2(%arg0: i32) -> (i32, i32) {
    %c0_i32 = arith.constant 0 : i32
    %c0_i32_0 = arith.constant 0 : i32
    return %c0_i32, %arg0 : i32, i32
  }
  func.func @transform_3(%arg0: i32) -> (i32, i32) {
    %c0_i32 = arith.constant 0 : i32
    %c0_i32_0 = arith.constant 0 : i32
    return %c0_i32, %arg0 : i32, i32
  }
}

</mosaic_0001>

<llo_original>
// kernel: tpu_custom_call.1
$region0: #{tpu_custom_call.1}
  #allocation0 [shape = 'u32[]', space=smem, size = 0x4, offset = 0x4, fixed_abs, tag = 'smem constant byte address 0x4 - core index']
  #allocation1 [shape = 'u32[72,128]{1,0:T(1,128)}', space=vmem, size = 0x9000, scoped, tag = 'internal scratch']
  %s0 = inlined_call_operand.hbm [shape: bf16[8,32], index: 0, kind: input, shape index: {}]
  %s1 = inlined_call_operand.hbm [shape: bf16[32,128], index: 1, kind: input, shape index: {}]
  %s2 = inlined_call_operand.hbm [shape: f32[8,128], index: 2, kind: input, shape index: {}]
  %s3 = inlined_call_operand.hbm [shape: f32[8,128], index: 3, kind: output, shape index: {}]
  %s4 = sld [smem:[#allocation0]]
  $region34: #{tpu_custom_call.1} parent=0
    _
  %s6 = ssub.s32 1, %s4
  %s7 = scalar_select 0, %s6, %s4
  $region1: #{tpu_custom_call.1} parent=0
    #allocation2 [shape = 'u8[2048]{0}', space=vmem, size = 0x800, scoped, tag = 'input window, operand 0, single buffered']
    #allocation3 [shape = 's32[1]{0}', space=sflag, size = 0x4, scoped, tag = 'scoped memory for tpu_custom_call.1']
    #allocation4 [shape = 's32[1]{0}', space=sflag, size = 0x4, scoped, tag = 'scoped memory for tpu_custom_call.1']
    #allocation5 [shape = 'u8[8192]{0}', space=vmem, size = 0x2000, scoped, tag = 'input window, operand 1, single buffered']
    #allocation6 [shape = 's32[1]{0}', space=sflag, size = 0x4, scoped, tag = 'scoped memory for tpu_custom_call.1']
    #allocation7 [shape = 'u8[4096]{0}', space=vmem, size = 0x1000, scoped, tag = 'input window, operand 2, single buffered']
    #allocation8 [shape = 'u8[4096]{0}', space=vmem, size = 0x1000, scoped, tag = 'output window, operand 0, single buffered']
    %8 = vsyncpa [#allocation3], 0
    %9 = vsyncpa [#allocation6], 0
    %10 = vsyncpa [#allocation4], 0
    // Predicated region
    $region2: #{tpu_custom_call.1} parent=1 // pred_check
      _
    $region3: #{tpu_custom_call.1} parent=1 // pred_check_branch
      %12 = sbr.rel (0) target = $region5
    $region4: #{tpu_custom_call.1} parent=1 // pred_region
      %14 = vsyncadd [#allocation3], 0
      %s16 = sshll.u32 %s0, 4
      %s17 = int_to_ptr.hbm [resolvable:$true] %s16
      %s18 = sshll.u32 [#allocation2], 4
      %s19 = int_to_ptr.vmem [resolvable:$true] %s18
      %21 = dma.hbm_to_vmem [thread:$0]  %s17, 64, %s19, [#allocation3]
    $region5: #{tpu_custom_call.1} parent=1 // pred_fallthru
      _
    // Predicated region
    $region6: #{tpu_custom_call.1} parent=1 // pred_check
      _
    $region7: #{tpu_custom_call.1} parent=1 // pred_check_branch
      %23 = sbr.rel (0) target = $region9
    $region8: #{tpu_custom_call.1} parent=1 // pred_region
      %25 = vsyncadd [#allocation6], 0
      %s26 = sshll.u32 %s1, 4
      %s27 = int_to_ptr.hbm [resolvable:$true] %s26
      %s28 = sshll.u32 [#allocation5], 4
      %s29 = int_to_ptr.vmem [resolvable:$true] %s28
      %34 = dma.hbm_to_vmem [thread:$0]  %s27, 256, %s29, [#allocation6], 64, 64, 4
    $region9: #{tpu_custom_call.1} parent=1 // pred_fallthru
      _
    // Predicated region
    $region10: #{tpu_custom_call.1} parent=1 // pred_check
      _
    $region11: #{tpu_custom_call.1} parent=1 // pred_check_branch
      %36 = sbr.rel (0) target = $region13
    $region12: #{tpu_custom_call.1} parent=1 // pred_region
      %38 = vsyncadd [#allocation6], 0
      %s40 = sshll.u32 %s2, 4
      %s41 = int_to_ptr.hbm [resolvable:$true] %s40
      %s42 = sshll.u32 [#allocation7], 4
      %s43 = int_to_ptr.vmem [resolvable:$true] %s42
      %45 = dma.hbm_to_vmem [thread:$0]  %s41, 128, %s43, [#allocation6]
    $region13: #{tpu_custom_call.1} parent=1 // pred_fallthru
      _
    // Predicated region
    $region14: #{tpu_custom_call.1} parent=1 // pred_check
      _
    $region15: #{tpu_custom_call.1} parent=1 // pred_check_branch
      %47 = sbr.rel (0) target = $region17
    $region16: #{tpu_custom_call.1} parent=1 // pred_region
      %49 = dma.done [#allocation3], 64
    $region17: #{tpu_custom_call.1} parent=1 // pred_fallthru
      _
    // Predicated region
    $region18: #{tpu_custom_call.1} parent=1 // pred_check
      _
    $region19: #{tpu_custom_call.1} parent=1 // pred_check_branch
      %51 = sbr.rel (0) target = $region21
    $region20: #{tpu_custom_call.1} parent=1 // pred_region
      %53 = dma.done [#allocation6], 256
    $region21: #{tpu_custom_call.1} parent=1 // pred_fallthru
      _
    // Predicated region
    $region22: #{tpu_custom_call.1} parent=1 // pred_check
      _
    $region23: #{tpu_custom_call.1} parent=1 // pred_check_branch
      %55 = sbr.rel (0) target = $region25
    $region24: #{tpu_custom_call.1} parent=1 // pred_region
      %57 = dma.done [#allocation6], 128
    $region25: #{tpu_custom_call.1} parent=1 // pred_fallthru
      _
    %v59 = vld [vmem:[#allocation2] sm:$0xf]
    %v60 = vld [vmem:[#allocation5] sm:$0xf]
    %v61 = vld [vmem:[#allocation5 + $0x4] sm:$0xf]
    %v62 = vld [vmem:[#allocation5 + $0x8] sm:$0xf]
    %v63 = vld [vmem:[#allocation5 + $0xc] sm:$0xf]
    %v68 = vunpack.c.l.b16 %v60
    %v69 = vunpack.c.l.b16 %v61
    %v70 = vunpack.c.l.b16 %v62
    %v71 = vunpack.c.l.b16 %v63
    %v72 = vpack.c.b16 %v69, %v68
    %v73 = vpack.c.b16 %v71, %v70
    %vm76 = vcmask 261120
    %v78 = vsel %vm76, %v59, 0
    %80 = vmatpush.bf16.msra.mxu0 0
    %81 = vmatpush.bf16.msra.mxu0 0
    %82 = vmatpush.bf16.msra.mxu0 0
    %83 = vmatpush.bf16.msra.mxu0 0
    %84 = vmatpush.bf16.msra.mxu0 0
    %85 = vmatpush.bf16.msra.mxu0 0
    %86 = vmatpush.bf16.msra.mxu0 %v73
    %87 = vmatpush.bf16.msra.mxu0 %v72
    %88 = vmatmul.bf16.gmra.mxu0 %v78
    %v89 = vpop.f32.mrf.mxu0
    %v90 = vadd.f32 0.0, %v89
    %v91 = vpop.f32.mrf.mxu0
    %92 = vdwg.mxu0
    %v93 = vld [vmem:[#allocation7] sm:$0xff]
    %v94 = vrot.slane %v90, 4
    %v95 = vadd.f32 %v90, %v94
    %v96 = vrot.slane %v95, 2
    %v97 = vadd.f32 %v95, %v96
    %v98 = vrot.slane %v97, 1
    %v99 = vadd.f32 %v97, %v98
    %v100 = vmul.f32 %v99, 0.125
    %v101 = vsub.f32 %v90, %v100
    %v102 = vmul.f32 %v101, %v101
    %v103 = vrot.slane %v102, 4
    %v104 = vadd.f32 %v102, %v103
    %v105 = vrot.slane %v104, 2
    %v106 = vadd.f32 %v104, %v105
    %v107 = vrot.slane %v106, 1
    %v108 = vadd.f32 %v106, %v107
    %v109 = vmul.f32 %v108, 0.125
    %v110 = vadd.f32 %v109, 1e-05
    %v111 = vrsqrt.pop %v110
    %v112 = vmul.f32 %v111, %v110
    %v113 = vmul.f32 %v112, %v111
    %v114 = vmul.f32 0.5, %v113
    %v115 = vsub.f32 1.5, %v114
    %v116 = vmul.f32 %v111, %v115
    %vm117 = vweird.f32 %v110
    %vm118 = vweird.f32 %v111
    %vm119 = vmor %vm117, %vm118
    %v120 = vsel %vm119, %v111, %v116
    %v121 = vmul.f32 %v120, %v93
    %v122 = vperm.slane %v121, 1
    %v123 = vmul.f32 %v101, %v122
    %v124 = vperm.slane %v93, 2
    %v125 = vadd.f32 %v123, %v124
    %v126 = vtanh.pop %v125
    %127 = vst [vmem:[#allocation8] sm:$0xff] %v126
    // Predicated region
    $region26: #{tpu_custom_call.1} parent=1 // pred_check
      _
    $region27: #{tpu_custom_call.1} parent=1 // pred_check_branch
      %129 = sbr.rel (0) target = $region29
    $region28: #{tpu_custom_call.1} parent=1 // pred_region
      %131 = vsyncadd [#allocation4], 0
      %s133 = sshll.u32 [#allocation8], 4
      %s134 = int_to_ptr.vmem [resolvable:$true] %s133
      %s135 = sshll.u32 %s3, 4
      %s136 = int_to_ptr.hbm [resolvable:$true] %s135
      %138 = dma.vmem_to_hbm [thread:$0]  %s134, 128, %s136, [#allocation4]
    $region29: #{tpu_custom_call.1} parent=1 // pred_fallthru
      _
    // Predicated region
    $region30: #{tpu_custom_call.1} parent=1 // pred_check
      _
    $region31: #{tpu_custom_call.1} parent=1 // pred_check_branch
      %140 = sbr.rel (0) target = $region33
    $region32: #{tpu_custom_call.1} parent=1 // pred_region
      %142 = dma.done [#allocation4], 128
    $region33: #{tpu_custom_call.1} parent=1 // pred_fallthru
      _
    %143 = vsyncpa [#allocation3], 1
    %144 = vsyncpa [#allocation6], 1
    %145 = vsyncpa [#allocation4], 1

</llo_original>
